<compile_context>
chip_gen: v5e
topology: v5e:2x2
jax: 0.10.0
libtpu: 0.0.40
codegen_flags: <defaults>
</compile_context>

<pallas_src>
import numpy as np
import jax
import jax.numpy as jnp
from jax.experimental import pallas as pl
from jax.experimental.pallas import tpu as pltpu


# ---------------------------------------------------------------------------
# Roll-based central difference:  g[i] = f[i+step] - f[i-step]  along `axis`
# (circular; wrapped boundary entries are removed later by the interior mask).
# This is 2x the true central derivative; the 0.5 factor is hoisted.
# ---------------------------------------------------------------------------
def _neighbor_diff(f, axis, step):
    size = f.shape[axis]
    fwd = pltpu.roll(f, shift=(size - step) % size, axis=axis)  # f[i + step]
    bwd = pltpu.roll(f, shift=step % size, axis=axis)           # f[i - step]
    return fwd - bwd


# ---------------------------------------------------------------------------
# Kernels.  Per grid step n they see one (1, D, H*W) volume slab plus the
# (D, H*W) interior mask, and write one per-volume raw partial sum.
# ---------------------------------------------------------------------------
def _make_gradient_kernel(W, flag_l1):
    def kernel(x_ref, mask_ref, out_ref):
        f = x_ref[0]                      # (D, HW) float32
        m = mask_ref[...]                 # (D, HW) interior mask (1.0 / 0.0)
        gx = _neighbor_diff(f, 0, 1)      # d/dD  (= 2*dTdx)
        gy = _neighbor_diff(f, 1, W)      # d/dH  (= 2*dTdy)
        gz = _neighbor_diff(f, 1, 1)      # d/dW  (= 2*dTdz)
        if flag_l1:
            v = jnp.abs(gx) + jnp.abs(gy) + jnp.abs(gz)
        else:
            v = gx * gx + gy * gy + gz * gz
        s = jnp.sum(v * m)
        out_ref[...] = jnp.full((1, 8, 128), s, dtype=jnp.float32)

    return kernel


def _make_bending_kernel(W):
    def kernel(x_ref, mask_ref, out_ref):
        f = x_ref[0]                      # (D, HW)
        m = mask_ref[...]                 # (D, HW) double-interior mask
        # ---- dTdx family (reduce-as-you-go, then drop gx) -----------------
        gx = _neighbor_diff(f, 0, 1)           # 2*dTdx
        t = _neighbor_diff(gx, 0, 1)           # 4*dTdxx
        e = t * t
        t = _neighbor_diff(gx, 1, W)           # 4*dTdxy
        e = e + 2.0 * t * t
        t = _neighbor_diff(gx, 1, 1)           # 4*dTdxz
        e = e + 2.0 * t * t
        # ---- dTdy family ---------------------------------------------------
        gy = _neighbor_diff(f, 1, W)           # 2*dTdy
        t = _neighbor_diff(gy, 1, W)           # 4*dTdyy
        e = e + t * t
        t = _neighbor_diff(gy, 1, 1)           # 4*dTdyz
        e = e + 2.0 * t * t
        # ---- dTdz family ---------------------------------------------------
        gz = _neighbor_diff(f, 1, 1)           # 2*dTdz
        t = _neighbor_diff(gz, 1, 1)           # 4*dTdzz
        e = e + t * t
        s = jnp.sum(e * m)
        out_ref[...] = jnp.full((1, 8, 128), s, dtype=jnp.float32)

    return kernel


# ---------------------------------------------------------------------------
# Wrapper (equivalent of DisplacementRegularizer(energy_type)(disp, _))
# ---------------------------------------------------------------------------
def _interior_mask(D, H, W, k):
    """(D, H*W) float32 mask: 1.0 where d,h,w are all in [k, dim-1-k]."""
    def band(n):
        i = np.arange(n)
        return (i >= k) & (i <= n - 1 - k)

    m = band(D)[:, None, None] & band(H)[None, :, None] & band(W)[None, None, :]
    return jnp.asarray(m.reshape(D, H * W).astype(np.float32))


def displacement_regularizer(disp, _unused=None, *, energy_type="gradient-l2"):
    B, C, D, H, W = disp.shape
    if C != 3:
        raise ValueError("expected 3 displacement channels (B, 3, D, H, W)")
    N, HW = B * C, H * W
    x = disp.reshape(N, D, HW).astype(jnp.float32)   # lane-dense layout

    if energy_type == "bending":
        kernel = _make_bending_kernel(W)
        mask = _interior_mask(D, H, W, 2)
        count = N * (D - 4) * (H - 4) * (W - 4)
        scale = 1.0 / (16.0 * count)                  # (1/4)^2 per 2nd-deriv
    elif energy_type == "gradient-l2":
        kernel = _make_gradient_kernel(W, flag_l1=False)
        mask = _interior_mask(D, H, W, 1)
        count = N * (D - 2) * (H - 2) * (W - 2)
        scale = 0.25 / (3.0 * count)                  # (1/2)^2 and /3
    elif energy_type == "gradient-l1":
        kernel = _make_gradient_kernel(W, flag_l1=True)
        mask = _interior_mask(D, H, W, 1)
        count = N * (D - 2) * (H - 2) * (W - 2)
        scale = 0.5 / (3.0 * count)                   # 1/2 and /3
    else:
        raise Exception("Not recognised local regulariser!")

    partials = pl.pallas_call(
        kernel,
        out_shape=jax.ShapeDtypeStruct((N, 8, 128), jnp.float32),
        grid=(N,),
        in_specs=[
            pl.BlockSpec((1, D, HW), lambda n: (n, 0, 0)),   # one volume slab
            pl.BlockSpec((D, HW), lambda n: (0, 0)),         # constant mask
        ],
        out_specs=pl.BlockSpec((1, 8, 128), lambda n: (n, 0, 0)),
        compiler_params=pltpu.CompilerParams(
            dimension_semantics=("parallel",),
            vmem_limit_bytes=48 * 1024 * 1024,
        ),
    )(x, mask)

    return jnp.sum(partials[:, 0, 0]) * scale


# ---------------------------------------------------------------------------
# Pure-JAX reference (direct transcription of the PyTorch module) for checking
# ---------------------------------------------------------------------------
def _rdx(f):
    return (f[:, :, 2:, 1:-1, 1:-1] - f[:, :, :-2, 1:-1, 1:-1]) * 0.5


def _rdy(f):
    return (f[:, :, 1:-1, 2:, 1:-1] - f[:, :, 1:-1, :-2, 1:-1]) * 0.5


def _rdz(f):
    return (f[:, :, 1:-1, 1:-1, 2:] - f[:, :, 1:-1, 1:-1, :-2]) * 0.5


def _reference(disp, energy_type):
    dTdx, dTdy, dTdz = _rdx(disp), _rdy(disp), _rdz(disp)
    if energy_type == "gradient-l2":
        return jnp.mean(dTdx ** 2 + dTdy ** 2 + dTdz ** 2) / 3.0
    if energy_type == "gradient-l1":
        return jnp.mean(jnp.abs(dTdx) + jnp.abs(dTdy) + jnp.abs(dTdz)) / 3.0
    dTdxx, dTdyy, dTdzz = _rdx(dTdx), _rdy(dTdy), _rdz(dTdz)
    dTdxy, dTdyz, dTdxz = _rdy(dTdx), _rdz(dTdy), _rdz(dTdx)
    return jnp.mean(dTdxx ** 2 + dTdyy ** 2 + dTdzz ** 2
                    + 2 * dTdxy ** 2 + 2 * dTdxz ** 2 + 2 * dTdyz ** 2)


if __name__ == "__main__":
    key = jax.random.PRNGKey(0)
    B, C, D, H, W = 2, 3, 16, 16, 16   # 3 channels: x/y/z displacement
    disp = jax.random.normal(key, (B, C, D, H, W), dtype=jnp.float32)

    for et in ("gradient-l2", "gradient-l1", "bending"):
        val = displacement_regularizer(disp, None, energy_type=et)
        val = float(jax.block_until_ready(val))
        ref = float(_reference(disp, et))
        assert np.isfinite(val), (et, val)
        assert abs(val - ref) <= 1e-4 * max(1.0, abs(ref)), (et, val, ref)

    print("KERNEL_OK")
</pallas_src>

<mosaic_0001>
module attributes {stable_mosaic.version = 11 : i64} {
  func.func @kernel(%arg0: i32, %arg1: memref<1x16x256xf32, #tpu.memory_space<vmem>>, %arg2: memref<16x256xf32, #tpu.memory_space<vmem>>, %arg3: memref<1x8x128xf32, #tpu.memory_space<vmem>>) attributes {dimension_semantics = [#tpu.dimension_semantics<parallel>], iteration_bounds = array<i64: 6>, scalar_prefetch = 0 : i64, scratch_operands = 0 : i64, tpu.core_type = #tpu.core_type<tc>, window_params = [{transform_indices = @transform_0, window_bounds = array<i64: 1, 16, 256>}, {pipeline_mode = #tpu.pipeline_mode<synchronous>, transform_indices = @transform_1, window_bounds = array<i64: 16, 256>}, {transform_indices = @transform_2, window_bounds = array<i64: 1, 8, 128>}]} {
    %c0 = arith.constant 0 : index
    %c0_0 = arith.constant 0 : index
    %c0_1 = arith.constant 0 : index
    %0 = vector.load %arg1[%c0, %c0_0, %c0_1] : memref<1x16x256xf32, #tpu.memory_space<vmem>>, vector<1x16x256xf32>
    %1 = vector.shape_cast %0 : vector<1x16x256xf32> to vector<16x256xf32>
    %c0_2 = arith.constant 0 : index
    %c0_3 = arith.constant 0 : index
    %2 = vector.load %arg2[%c0_2, %c0_3] : memref<16x256xf32, #tpu.memory_space<vmem>>, vector<16x256xf32>
    %c15_i32 = arith.constant 15 : i32
    %3 = tpu.dynamic_rotate %1 by %c15_i32 dim 0 : vector<16x256xf32>, i32 -> vector<16x256xf32>
    %c1_i32 = arith.constant 1 : i32
    %4 = tpu.dynamic_rotate %1 by %c1_i32 dim 0 : vector<16x256xf32>, i32 -> vector<16x256xf32>
    %5 = arith.subf %3, %4 : vector<16x256xf32>
    %c240_i32 = arith.constant 240 : i32
    %6 = tpu.dynamic_rotate %1 by %c240_i32 dim 1 : vector<16x256xf32>, i32 -> vector<16x256xf32>
    %c16_i32 = arith.constant 16 : i32
    %7 = tpu.dynamic_rotate %1 by %c16_i32 dim 1 : vector<16x256xf32>, i32 -> vector<16x256xf32>
    %8 = arith.subf %6, %7 : vector<16x256xf32>
    %c255_i32 = arith.constant 255 : i32
    %9 = tpu.dynamic_rotate %1 by %c255_i32 dim 1 : vector<16x256xf32>, i32 -> vector<16x256xf32>
    %c1_i32_4 = arith.constant 1 : i32
    %10 = tpu.dynamic_rotate %1 by %c1_i32_4 dim 1 : vector<16x256xf32>, i32 -> vector<16x256xf32>
    %11 = arith.subf %9, %10 : vector<16x256xf32>
    %12 = arith.mulf %5, %5 : vector<16x256xf32>
    %13 = arith.mulf %8, %8 : vector<16x256xf32>
    %14 = arith.addf %12, %13 : vector<16x256xf32>
    %15 = arith.mulf %11, %11 : vector<16x256xf32>
    %16 = arith.addf %14, %15 : vector<16x256xf32>
    %17 = arith.mulf %16, %2 : vector<16x256xf32>
    %18 = vector.shape_cast %17 : vector<16x256xf32> to vector<1x16x256xf32>
    %cst = arith.constant dense<0.000000e+00> : vector<1xf32>
    %19 = vector.multi_reduction <add>, %18, %cst [1, 2] : vector<1x16x256xf32> to vector<1xf32>
    %20 = vector.shape_cast %19 : vector<1xf32> to vector<1x1x1xf32>
    %21 = vector.extract %20[0, 0, 0] : f32 from vector<1x1x1xf32>
    %22 = vector.broadcast %21 : f32 to vector<1x8x128xf32>
    %c0_5 = arith.constant 0 : index
    %c0_6 = arith.constant 0 : index
    %c0_7 = arith.constant 0 : index
    %23 = vector.load %arg3[%c0_5, %c0_6, %c0_7] : memref<1x8x128xf32, #tpu.memory_space<vmem>>, vector<1x8x128xf32>
    tpu.vector_store %arg3[%c0_5, %c0_6, %c0_7], %22 {strides = array<i32>} : memref<1x8x128xf32, #tpu.memory_space<vmem>>, vector<1x8x128xf32>,
    return
  }
  func.func @transform_0(%arg0: i32) -> (i32, i32, i32) {
    %c0_i32 = arith.constant 0 : i32
    %c0_i32_0 = arith.constant 0 : i32
    %c0_i32_1 = arith.constant 0 : i32
    return %arg0, %c0_i32, %c0_i32_0 : i32, i32, i32
  }
  func.func @transform_1(%arg0: i32) -> (i32, i32) {
    %c0_i32 = arith.constant 0 : i32
    %c0_i32_0 = arith.constant 0 : i32
    %c0_i32_1 = arith.constant 0 : i32
    return %c0_i32, %c0_i32_0 : i32, i32
  }
  func.func @transform_2(%arg0: i32) -> (i32, i32, i32) {
    %c0_i32 = arith.constant 0 : i32
    %c0_i32_0 = arith.constant 0 : i32
    %c0_i32_1 = arith.constant 0 : i32
    return %arg0, %c0_i32, %c0_i32_0 : i32, i32, i32
  }
}

</mosaic_0001>

<llo_original>
// kernel: tpu_custom_call.1
$region0: #{tpu_custom_call.1}
  #allocation0 [shape = 'u32[]', space=smem, size = 0x4, offset = 0x4, fixed_abs, tag = 'smem constant byte address 0x4 - core index']
  #allocation1 [shape = 'u32[72,128]{1,0:T(1,128)}', space=vmem, size = 0x9000, scoped, tag = 'internal scratch']
  %s0 = inlined_call_operand.hbm [shape: f32[6,16,256], index: 0, kind: input, shape index: {}]
  %s1 = inlined_call_operand.hbm [shape: f32[16,256], index: 1, kind: input, shape index: {}]
  %s2 = inlined_call_operand.hbm [shape: f32[6,8,128], index: 2, kind: output, shape index: {}]
  %s3 = sld [smem:[#allocation0]]
  $region49: #{tpu_custom_call.1} parent=0
    _
  %s5 = ssub.s32 1, %s3
  %s6 = scalar_select 0, %s5, %s3
  $region1: #{tpu_custom_call.1} parent=0
    #allocation2 [shape = 'u8[32768]{0}', space=vmem, size = 0x8000, scoped, tag = 'input window, operand 0']
    #allocation3 [shape = 's32[2]{0}', space=sflag, size = 0x8, scoped, tag = 'scoped memory for tpu_custom_call.1']
    #allocation4 [shape = 's32[2]{0}', space=sflag, size = 0x8, scoped, tag = 'scoped memory for tpu_custom_call.1']
    #allocation5 [shape = 'u8[16384]{0}', space=vmem, size = 0x4000, scoped, tag = 'input window, operand 1, single buffered']
    #allocation6 [shape = 's32[1]{0}', space=sflag, size = 0x4, scoped, tag = 'scoped memory for tpu_custom_call.1']
    #allocation7 [shape = 'u8[8192]{0}', space=vmem, size = 0x2000, scoped, tag = 'output window, operand 0']
    %7 = vsyncpa [#allocation3], 0
    %s8 = scalar_lea.sflag [#allocation3], 1
    %9 = vsyncpa %s8, 0
    %10 = vsyncpa [#allocation6], 0
    %11 = vsyncpa [#allocation4], 0
    %s12 = scalar_lea.sflag [#allocation4], 1
    %13 = vsyncpa %s12, 0
    loop: start=0, step=1, limit=8
    $region2: #{tpu_custom_call.1} parent=1 // loop_pre_header
      _
    $region3: #{tpu_custom_call.1} parent=1 // loop_header
      %s15 = sphi 0, %s19
      %p16 = scmp.ge.s32.totalorder %s15, 8
      %s25 = sphi 0, %s27
      %s28 = sphi 0, %s25
      %s29 = sphi 0, %s28
      %s45 = sphi 0, %s29
      %s49 = sphi 0, %s49
      %s51 = sphi 0, %s49
      %s52 = sphi 0, %s51
      %s66 = sphi 0, %s52
      %s72 = sphi 0, %s74
      %s75 = sphi 0, %s72
      %s76 = sphi 0, %s75
      %s92 = sphi 0, %s76
    $region4: #{tpu_custom_call.1} parent=1 // loop_header_branch
      %18 = sbr.rel (%p16) target = $region8
    $region5: #{tpu_custom_call.1} parent=1 // loop_body
      %s20 = ssub.s32 %s15, 1
      %s21 = ssub.s32 %s15, 2
      %s22 = sadd.s32 %s15, 1
      %s23 = ssub.s32 %s15, %s22
      %p24 = scmp.eq.s32.totalorder %s23, 0
      %s26 = sadd.s32 %s25, 1
      %s27 = scalar_select %p24, %s25, %s26
      %p30 = pneg %p24
      %p31 = scmp.eq.s32.totalorder %s15, 5
      %p32 = por %p30, %p31
      %p33 = scmp.ne.s32.totalorder %s25, %s28
      %p34 = scmp.eq.s32.totalorder %s15, 0
      %p35 = por %p33, %p34
      %p36 = scmp.ne.s32.totalorder %s25, %s28
      %p37 = scmp.eq.s32.totalorder %s20, 5
      %p38 = por %p36, %p37
      %p39 = scmp.ne.s32.totalorder %s28, %s29
      %p40 = scmp.eq.s32.totalorder %s20, 0
      %p41 = por %p39, %p40
      %p42 = scmp.ne.s32.totalorder %s28, %s29
      %p43 = scmp.eq.s32.totalorder %s21, 5
      %p44 = por %p42, %p43
      %p46 = scmp.ne.s32.totalorder %s29, %s45
      %p47 = scmp.eq.s32.totalorder %s21, 0
      %p48 = por %p46, %p47
      %s50 = sadd.s32 %s49, 1
      %p53 = scmp.eq.s32.totalorder %s15, 5
      %p54 = scmp.ne.s32.totalorder %s49, %s51
      %p55 = scmp.eq.s32.totalorder %s15, 0
      %p56 = por %p54, %p55
      %p57 = scmp.ne.s32.totalorder %s49, %s51
      %p58 = scmp.eq.s32.totalorder %s20, 5
      %p59 = por %p57, %p58
      %p60 = scmp.ne.s32.totalorder %s51, %s52
      %p61 = scmp.eq.s32.totalorder %s20, 0
      %p62 = por %p60, %p61
      %p63 = scmp.ne.s32.totalorder %s51, %s52
      %p64 = scmp.eq.s32.totalorder %s21, 5
      %p65 = por %p63, %p64
      %p67 = scmp.ne.s32.totalorder %s52, %s66
      %p68 = scmp.eq.s32.totalorder %s21, 0
      %p69 = por %p67, %p68
      %s70 = ssub.s32 %s15, %s22
      %p71 = scmp.eq.s32.totalorder %s70, 0
      %s73 = sadd.s32 %s72, 1
      %s74 = scalar_select %p71, %s72, %s73
      %p77 = pneg %p71
      %p78 = scmp.eq.s32.totalorder %s15, 5
      %p79 = por %p77, %p78
      %p80 = scmp.ne.s32.totalorder %s72, %s75
      %p81 = scmp.eq.s32.totalorder %s15, 0
      %p82 = por %p80, %p81
      %p83 = scmp.ne.s32.totalorder %s72, %s75
      %p84 = scmp.eq.s32.totalorder %s20, 5
      %p85 = por %p83, %p84
      %p86 = scmp.ne.s32.totalorder %s75, %s76
      %p87 = scmp.eq.s32.totalorder %s20, 0
      %p88 = por %p86, %p87
      %p89 = scmp.ne.s32.totalorder %s75, %s76
      %p90 = scmp.eq.s32.totalorder %s21, 5
      %p91 = por %p89, %p90
      %p93 = scmp.ne.s32.totalorder %s76, %s92
      %p94 = scmp.eq.s32.totalorder %s21, 0
      %p95 = por %p93, %p94
      %p96 = scmp.le.s32.totalorder 1, %s15
      %p97 = scmp.lt.s32.totalorder %s15, 7
      %p98 = pnand %p96, %p97
      %p99 = pneg %p98
      // Predicated region
      $region9: #{tpu_custom_call.1} parent=5 // pred_check
        _
      $region10: #{tpu_custom_call.1} parent=5 // pred_check_branch
        %101 = sbr.rel (%p98) target = $region12
      $region11: #{tpu_custom_call.1} parent=5 // pred_region
        %s102 = ssub.s32 %s15, 1
        // Predicated region
        $region13: #{tpu_custom_call.1} parent=11 // pred_check
          %p103 = pneg %p62
        $region14: #{tpu_custom_call.1} parent=11 // pred_check_branch
          %105 = sbr.rel (%p103) target = $region16
        $region15: #{tpu_custom_call.1} parent=11 // pred_region
          %107 = vsyncadd [#allocation6], 0
          %s108 = sshll.u32 %s1, 4
          %s109 = int_to_ptr.hbm [resolvable:$true] %s108
          %s110 = sshll.u32 [#allocation5], 4
          %s111 = int_to_ptr.vmem [resolvable:$true] %s110
          %116 = dma.hbm_to_vmem [thread:$0]  %s109, 512, %s111, [#allocation6], 256, 256, 16
        $region16: #{tpu_custom_call.1} parent=11 // pred_fallthru
          _
      $region12: #{tpu_custom_call.1} parent=5 // pred_fallthru
        _
      %p117 = scmp.lt.s32.totalorder %s15, 6
      // Predicated region
      $region17: #{tpu_custom_call.1} parent=5 // pred_check
        %p118 = pneg %p117
      $region18: #{tpu_custom_call.1} parent=5 // pred_check_branch
        %120 = sbr.rel (%p118) target = $region20
      $region19: #{tpu_custom_call.1} parent=5 // pred_region
        // Predicated region
        $region21: #{tpu_custom_call.1} parent=19 // pred_check
          %p121 = pneg %p35
        $region22: #{tpu_custom_call.1} parent=19 // pred_check_branch
          %123 = sbr.rel (%p121) target = $region24
        $region23: #{tpu_custom_call.1} parent=19 // pred_region
          %s124 = sand.u32 %s25, 1
          %s125 = scalar_lea.sflag [#allocation3], %s124
          %s126 = sand.u32 %s25, 1
          %s127 = smul.addr %s126, 32
          %s128 = scalar_lea.vmem [#allocation2], %s127
          %130 = vsyncadd %s125, 0
          %s131 = smul.addr %s15, 4
          %s132 = smul.addr %s131, 8
          %s133 = scalar_lea.hbm %s0, %s132
          %s134 = sshll.u32 %s133, 4
          %s135 = int_to_ptr.hbm [resolvable:$true] %s134
          %s136 = sshll.u32 %s128, 4
          %s137 = int_to_ptr.vmem [resolvable:$true] %s136
          %142 = dma.hbm_to_vmem [thread:$0]  %s135, 512, %s137, %s125, 256, 256, 16
        $region24: #{tpu_custom_call.1} parent=19 // pred_fallthru
          _
      $region20: #{tpu_custom_call.1} parent=5 // pred_fallthru
        _
      %p143 = scmp.le.s32.totalorder 1, %s15
      %p144 = scmp.lt.s32.totalorder %s15, 7
      %p145 = pnand %p143, %p144
      %p146 = pneg %p145
      // Predicated region
      $region25: #{tpu_custom_call.1} parent=5 // pred_check
        _
      $region26: #{tpu_custom_call.1} parent=5 // pred_check_branch
        %148 = sbr.rel (%p145) target = $region28
      $region27: #{tpu_custom_call.1} parent=5 // pred_region
        %s149 = ssub.s32 %s15, 1
        %s150 = sand.u32 %s28, 1
        %s151 = scalar_lea.sflag [#allocation3], %s150
        %s152 = sand.u32 %s28, 1
        %s153 = smul.addr %s152, 32
        %s154 = scalar_lea.vmem [#allocation2], %s153
        // Predicated region
        $region29: #{tpu_custom_call.1} parent=27 // pred_check
          %p155 = pneg %p41
        $region30: #{tpu_custom_call.1} parent=27 // pred_check_branch
          %157 = sbr.rel (%p155) target = $region32
        $region31: #{tpu_custom_call.1} parent=27 // pred_region
          %159 = dma.done %s151, 512
        $region32: #{tpu_custom_call.1} parent=27 // pred_fallthru
          _
        // Predicated region
        $region33: #{tpu_custom_call.1} parent=27 // pred_check
          %p160 = pneg %p62
        $region34: #{tpu_custom_call.1} parent=27 // pred_check_branch
          %162 = sbr.rel (%p160) target = $region36
        $region35: #{tpu_custom_call.1} parent=27 // pred_region
          %164 = dma.done [#allocation6], 512
        $region36: #{tpu_custom_call.1} parent=27 // pred_fallthru
          _
        %s165 = sand.u32 %s28, 1
        %s166 = scalar_lea.sflag [#allocation3], %s165
        %s167 = sand.u32 %s28, 1
        %s168 = smul.addr %s167, 32
        %s169 = scalar_lea.vmem [#allocation2], %s168
        %p170 = pneg %p41
        %p171 = pneg %p38
        %p172 = pneg %p62
        %p173 = pneg %p59
        %p174 = pneg %p88
        %p175 = pneg %p85
        %s176 = sand.u32 %s75, 1
        %s177 = scalar_lea.sflag [#allocation4], %s176
        %s178 = sand.u32 %s75, 1
        %s179 = smul.addr %s178, 8
        %s180 = scalar_lea.vmem [#allocation7], %s179
        %v181 = vld [vmem:[%s154] sm:$0xff]
        %v182 = vld [vmem:[%s154 + $0x8] sm:$0xff]
        %v183 = vld [vmem:[%s154 + $0x10] sm:$0xff]
        %v184 = vld [vmem:[%s154 + $0x18] sm:$0xff]
        %v185 = vld [vmem:[#allocation5] sm:$0xff]
        %v186 = vld [vmem:[#allocation5 + $0x8] sm:$0xff]
        %v187 = vld [vmem:[#allocation5 + $0x10] sm:$0xff]
        %v188 = vld [vmem:[#allocation5 + $0x18] sm:$0xff]
        %v189 = vrot.slane %v181, 1
        %v190 = vrot.slane %v182, 1
        %v191 = vrot.slane %v183, 1
        %v192 = vrot.slane %v184, 1
        %v193 = vlaneseq
        %v194 = vshrl.u32 %v193, 7
        %vm195 = vcmp.lt.s32.totalorder %v194, 7
        %v196 = vsel %vm195, %v189, %v191
        %v197 = vsel %vm195, %v190, %v192
        %v198 = vsel %vm195, %v191, %v189
        %v199 = vsel %vm195, %v192, %v190
        %v200 = vrot.slane %v181, 7
        %v201 = vrot.slane %v182, 7
        %v202 = vrot.slane %v183, 7
        %v203 = vrot.slane %v184, 7
        %vm204 = vcmp.lt.s32.totalorder %v194, 1
        %v205 = vsel %vm204, %v200, %v202
        %v206 = vsel %vm204, %v201, %v203
        %v207 = vsel %vm204, %v202, %v200
        %v208 = vsel %vm204, %v203, %v201
        %v209 = vsub.f32 %v196, %v207
        %v210 = vsub.f32 %v197, %v208
        %v211 = vsub.f32 %v198, %v205
        %v212 = vsub.f32 %v199, %v206
        %213 = vrot.lane.b32.xlu0 %v181, 112
        %v214 = vpop.permute.xlu0 %213
        %215 = vrot.lane.b32.xlu0 %v183, 112
        %v216 = vpop.permute.xlu0 %215
        %217 = vrot.lane.b32.xlu0 %v182, 112
        %v218 = vpop.permute.xlu0 %217
        %219 = vrot.lane.b32.xlu0 %v184, 112
        %v220 = vpop.permute.xlu0 %219
        %v221 = vlaneseq
        %v222 = vand.u32 %v221, 127
        %vm223 = vcmp.lt.s32.totalorder %v222, 112
        %v224 = vsel %vm223, %v214, %v218
        %v225 = vsel %vm223, %v216, %v220
        %v226 = vsel %vm223, %v218, %v214
        %v227 = vsel %vm223, %v220, %v216
        %228 = vrot.lane.b32.xlu0 %v181, 16
        %v229 = vpop.permute.xlu0 %228
        %230 = vrot.lane.b32.xlu0 %v183, 16
        %v231 = vpop.permute.xlu0 %230
        %232 = vrot.lane.b32.xlu0 %v182, 16
        %v233 = vpop.permute.xlu0 %232
        %234 = vrot.lane.b32.xlu0 %v184, 16
        %v235 = vpop.permute.xlu0 %234
        %vm236 = vcmp.lt.s32.totalorder %v222, 16
        %v237 = vsel %vm236, %v229, %v233
        %v238 = vsel %vm236, %v231, %v235
        %v239 = vsel %vm236, %v233, %v229
        %v240 = vsel %vm236, %v235, %v231
        %v241 = vsub.f32 %v224, %v239
        %v242 = vsub.f32 %v226, %v237
        %v243 = vsub.f32 %v225, %v240
        %v244 = vsub.f32 %v227, %v238
        %245 = vrot.lane.b32.xlu0 %v181, 127
        %v246 = vpop.permute.xlu0 %245
        %247 = vrot.lane.b32.xlu0 %v183, 127
        %v248 = vpop.permute.xlu0 %247
        %249 = vrot.lane.b32.xlu0 %v182, 127
        %v250 = vpop.permute.xlu0 %249
        %251 = vrot.lane.b32.xlu0 %v184, 127
        %v252 = vpop.permute.xlu0 %251
        %vm253 = vcmp.lt.s32.totalorder %v222, 127
        %v254 = vsel %vm253, %v246, %v250
        %v255 = vsel %vm253, %v248, %v252
        %v256 = vsel %vm253, %v250, %v246
        %v257 = vsel %vm253, %v252, %v248
        %258 = vrot.lane.b32.xlu0 %v181, 1
        %v259 = vpop.permute.xlu0 %258
        %260 = vrot.lane.b32.xlu0 %v183, 1
        %v261 = vpop.permute.xlu0 %260
        %262 = vrot.lane.b32.xlu0 %v182, 1
        %v263 = vpop.permute.xlu0 %262
        %264 = vrot.lane.b32.xlu0 %v184, 1
        %v265 = vpop.permute.xlu0 %264
        %vm266 = vcmp.lt.s32.totalorder %v222, 1
        %v267 = vsel %vm266, %v259, %v263
        %v268 = vsel %vm266, %v261, %v265
        %v269 = vsel %vm266, %v263, %v259
        %v270 = vsel %vm266, %v265, %v261
        %v271 = vsub.f32 %v254, %v269
        %v272 = vsub.f32 %v256, %v267
        %v273 = vsub.f32 %v255, %v270
        %v274 = vsub.f32 %v257, %v268
        %v275 = vmul.f32 %v209, %v209
        %v276 = vmul.f32 %v210, %v210
        %v277 = vmul.f32 %v211, %v211
        %v278 = vmul.f32 %v212, %v212
        %v279 = vmul.f32 %v241, %v241
        %v280 = vmul.f32 %v242, %v242
        %v281 = vmul.f32 %v243, %v243
        %v282 = vmul.f32 %v244, %v244
        %v283 = vadd.f32 %v275, %v279
        %v284 = vadd.f32 %v276, %v280
        %v285 = vadd.f32 %v277, %v281
        %v286 = vadd.f32 %v278, %v282
        %v287 = vmul.f32 %v271, %v271
        %v288 = vmul.f32 %v272, %v272
        %v289 = vmul.f32 %v273, %v273
        %v290 = vmul.f32 %v274, %v274
        %v291 = vadd.f32 %v283, %v287
        %v292 = vadd.f32 %v284, %v288
        %v293 = vadd.f32 %v285, %v289
        %v294 = vadd.f32 %v286, %v290
        %v295 = vmul.f32 %v291, %v185
        %v296 = vmul.f32 %v292, %v186
        %v297 = vmul.f32 %v293, %v187
        %v298 = vmul.f32 %v294, %v188
        %v299 = vadd.f32 %v295, %v296
        %v300 = vadd.f32 %v299, %v297
        %v301 = vadd.f32 %v300, %v298
        %302 = vadd.xlane.f32.xlu0 %v301
        %v303 = vpop.xlane.xlu0 %302
        %v304 = vrot.slane %v303, 4
        %v305 = vadd.f32 %v303, %v304
        %v306 = vrot.slane %v305, 2
        %v307 = vadd.f32 %v305, %v306
        %v308 = vrot.slane %v307, 1
        %v309 = vadd.f32 %v307, %v308
        %s310 = vtos %v309
        %v311 = vstv %s310
        %312 = vst [vmem:[%s180] sm:$0xff] %v311
        %s313 = sand.u32 %s75, 1
        %s314 = scalar_lea.sflag [#allocation4], %s313
        %s315 = sand.u32 %s75, 1
        %s316 = smul.addr %s315, 8
        %s317 = scalar_lea.vmem [#allocation7], %s316
        // Predicated region
        $region37: #{tpu_custom_call.1} parent=27 // pred_check
          %p318 = pneg %p85
        $region38: #{tpu_custom_call.1} parent=27 // pred_check_branch
          %320 = sbr.rel (%p318) target = $region40
        $region39: #{tpu_custom_call.1} parent=27 // pred_region
          %322 = vsyncadd %s314, 0
          %s323 = smul.addr %s20, 8
          %s324 = scalar_lea.hbm %s2, %s323
          %s326 = sshll.u32 %s317, 4
          %s327 = int_to_ptr.vmem [resolvable:$true] %s326
          %s328 = sshll.u32 %s324, 4
          %s329 = int_to_ptr.hbm [resolvable:$true] %s328
          %331 = dma.vmem_to_hbm [thread:$0]  %s327, 128, %s329, %s314
        $region40: #{tpu_custom_call.1} parent=27 // pred_fallthru
          _
      $region28: #{tpu_custom_call.1} parent=5 // pred_fallthru
        _
      %p332 = scmp.le.s32.totalorder 2, %s15
      // Predicated region
      $region41: #{tpu_custom_call.1} parent=5 // pred_check
        %p333 = pneg %p332
      $region42: #{tpu_custom_call.1} parent=5 // pred_check_branch
        %335 = sbr.rel (%p333) target = $region44
      $region43: #{tpu_custom_call.1} parent=5 // pred_region
        %s336 = ssub.s32 %s15, 2
        // Predicated region
        $region45: #{tpu_custom_call.1} parent=43 // pred_check
          %p337 = pneg %p91
        $region46: #{tpu_custom_call.1} parent=43 // pred_check_branch
          %339 = sbr.rel (%p337) target = $region48
        $region47: #{tpu_custom_call.1} parent=43 // pred_region
          %s340 = sand.u32 %s76, 1
          %s341 = scalar_lea.sflag [#allocation4], %s340
          %s342 = sand.u32 %s76, 1
          %s343 = smul.addr %s342, 8
          %s344 = scalar_lea.vmem [#allocation7], %s343
          %346 = dma.done %s341, 128
        $region48: #{tpu_custom_call.1} parent=43 // pred_fallthru
          _
      $region44: #{tpu_custom_call.1} parent=5 // pred_fallthru
        _
    $region6: #{tpu_custom_call.1} parent=1 // loop_footer
      %s19 = sadd.s32 1, %s15
    $region7: #{tpu_custom_call.1} parent=1 // loop_footer_branch
      %14 = sbr.rel target = $region3
    $region8: #{tpu_custom_call.1} parent=1 // loop_exit
      _
    %347 = vsyncpa [#allocation3], 1
    %s348 = scalar_lea.sflag [#allocation3], 1
    %349 = vsyncpa %s348, 1
    %350 = vsyncpa [#allocation6], 1
    %351 = vsyncpa [#allocation4], 1
    %s352 = scalar_lea.sflag [#allocation4], 1
    %353 = vsyncpa %s352, 1

</llo_original>
